<compile_context>
chip_gen: v7x
topology: tpu7x:2x2x1
jax: 0.10.0
libtpu: 0.0.40
codegen_flags: <defaults>
</compile_context>

<pallas_src>
import jax
import jax.numpy as jnp
import numpy as np
from jax.experimental import pallas as pl
from jax.experimental.pallas import tpu as pltpu

# Small shapes consistent with the module's 4-D EEG input convention.
B, T, E, C, K = 2, 16, 8, 1, 4        # batch, time, EEG channels, channel, classes
F = E * T * C                         # flattened feature dim = 128 (lane-dense)
KP = 128                              # lane-padded class dim for unmasked stores
TB = 256                              # batch tile for the gridded (large-B) path


def linear_head_kernel(x_ref, w_ref, b_ref, o_ref):
    """x_ref: (tb, F)   bf16 flattened, already-'transposed' input (lane-dense)
       w_ref: (F, KP)   bf16 lane-padded linear weight
       b_ref: (1, KP)   f32  lane-padded bias
       o_ref: (tb, KP)  f32  lane-padded logits
    Single MXU matmul (bf16 operands, f32 accumulation) + f32 bias add.
    """
    o_ref[...] = (
        jnp.dot(x_ref[...], w_ref[...], preferred_element_type=jnp.float32)
        + b_ref[...]
    )


def init_params(w, b):
    """One-time parameter prep (hoisted out of the per-call path):
    lane-pad the head to 128 output columns and cast the weight to bf16."""
    wp = jnp.zeros((w.shape[0], KP), jnp.bfloat16).at[:, :K].set(
        w.astype(jnp.bfloat16))                              # (F, KP) bf16
    bp = jnp.zeros((1, KP), jnp.float32).at[0, :K].set(
        b.astype(jnp.float32))                               # (1, KP) f32
    return wp, bp


def _braindecode_forward(x, wp, bp):
    """x: (B, T, E, C) in PyTorch order.  wp: (F, KP) bf16, bp: (1, KP) f32.

    Implements  transpose(1,2) -> flatten -> linear  with the transpose/flatten
    done as wrapper-side layout plumbing and the matmul in Pallas.
    """
    batch = x.shape[0]
    # torch.transpose(x, 1, 2): (B, T, E, C) -> (B, E, T, C), then flatten.
    xf = jnp.swapaxes(x, 1, 2).reshape(batch, -1).astype(jnp.bfloat16)  # (B, F)

    if batch >= TB and batch % TB == 0:
        # Large-batch path: batch-tiled grid, weight/bias stay VMEM-resident.
        out_p = pl.pallas_call(
            linear_head_kernel,
            out_shape=jax.ShapeDtypeStruct((batch, KP), jnp.float32),
            grid=(batch // TB,),
            in_specs=[
                pl.BlockSpec((TB, F), lambda i: (i, 0)),
                pl.BlockSpec((F, KP), lambda i: (0, 0)),
                pl.BlockSpec((1, KP), lambda i: (0, 0)),
            ],
            out_specs=pl.BlockSpec((TB, KP), lambda i: (i, 0)),
            compiler_params=pltpu.CompilerParams(
                dimension_semantics=("parallel",)),
        )(xf, wp, bp)
    else:
        # Tiny-batch path: no grid, whole operands live in VMEM.
        out_p = pl.pallas_call(
            linear_head_kernel,
            out_shape=jax.ShapeDtypeStruct((batch, KP), jnp.float32),
            in_specs=[
                pl.BlockSpec(memory_space=pltpu.MemorySpace.VMEM),
                pl.BlockSpec(memory_space=pltpu.MemorySpace.VMEM),
                pl.BlockSpec(memory_space=pltpu.MemorySpace.VMEM),
            ],
            out_specs=pl.BlockSpec(memory_space=pltpu.MemorySpace.VMEM),
        )(xf, wp, bp)

    # Slice the lane padding back off -> true (B, K) logits.
    return out_p[:, :K]


braindecode_forward = jax.jit(_braindecode_forward)


def _reference(x, w, b):
    """Pure-JAX reference of the exact forward semantics with the same bf16
    operand rounding as the kernel (f32 accumulation)."""
    xt = jnp.swapaxes(x, 1, 2).reshape(x.shape[0], -1)        # transpose+flatten
    xb = xt.astype(jnp.bfloat16).astype(jnp.float32)
    wb = w.astype(jnp.bfloat16).astype(jnp.float32)
    return xb @ wb + b.astype(jnp.float32)


if __name__ == "__main__":
    key = jax.random.PRNGKey(0)
    kx, kw, kb = jax.random.split(key, 3)

    # Deterministic inputs / parameters (synthetic, no checkpoint).
    x = jax.random.normal(kx, (B, T, E, C), jnp.float32)
    w = jax.random.normal(kw, (F, K), jnp.float32) * 0.1   # Linear weight
    b = jax.random.normal(kb, (K,), jnp.float32) * 0.1     # Linear bias

    # One-time parameter prep (padding + bf16 cast), outside the hot path.
    wp, bp = init_params(w, b)

    # Small-batch path (B=2).
    out = braindecode_forward(x, wp, bp)
    out = jax.block_until_ready(out)

    ref_bf16 = _reference(x, w, b)
    np.testing.assert_allclose(np.asarray(out), np.asarray(ref_bf16),
                               rtol=1e-3, atol=1e-3)
    # Loose check against the full-f32 math (bf16 operand rounding only).
    xt = jnp.swapaxes(x, 1, 2).reshape(B, -1)
    ref_f32 = xt @ w + b
    np.testing.assert_allclose(np.asarray(out), np.asarray(ref_f32),
                               rtol=2e-2, atol=2e-2)

    # Exercise the batch-tiled (gridded) path as well.
    BL = 2 * TB
    xl = jax.random.normal(jax.random.PRNGKey(1), (BL, T, E, C), jnp.float32)
    out_l = jax.block_until_ready(braindecode_forward(xl, wp, bp))
    ref_l = _reference(xl, w, b)
    np.testing.assert_allclose(np.asarray(out_l), np.asarray(ref_l),
                               rtol=1e-3, atol=1e-3)

    print("KERNEL_OK")
</pallas_src>

<mosaic_0001>
module attributes {stable_mosaic.version = 11 : i64} {
  func.func @linear_head_kernel(%arg0: memref<2x128xbf16, #tpu.memory_space<vmem>>, %arg1: memref<128x128xbf16, #tpu.memory_space<vmem>>, %arg2: memref<1x128xf32, #tpu.memory_space<vmem>>, %arg3: memref<2x128xf32, #tpu.memory_space<vmem>>) attributes {dimension_semantics = [], scalar_prefetch = 0 : i64, scratch_operands = 0 : i64, tpu.core_type = #tpu.core_type<tc>} {
    %c0 = arith.constant 0 : index
    %c0_0 = arith.constant 0 : index
    %0 = vector.load %arg0[%c0, %c0_0] : memref<2x128xbf16, #tpu.memory_space<vmem>>, vector<2x128xbf16>
    %c0_1 = arith.constant 0 : index
    %c0_2 = arith.constant 0 : index
    %1 = vector.load %arg1[%c0_1, %c0_2] : memref<128x128xbf16, #tpu.memory_space<vmem>>, vector<128x128xbf16>
    %cst = arith.constant dense<0.000000e+00> : vector<2x128xf32>
    %2 = tpu.matmul %0, %1, %cst {dimension_numbers = #tpu.dot_dimension_numbers<[1], [0], [0], [1], [0, 0, 1, 1], [], []>} : vector<2x128xbf16>, vector<128x128xbf16>, vector<2x128xf32> -> vector<2x128xf32>
    %c0_3 = arith.constant 0 : index
    %c0_4 = arith.constant 0 : index
    %3 = vector.load %arg2[%c0_3, %c0_4] : memref<1x128xf32, #tpu.memory_space<vmem>>, vector<1x128xf32>
    %4 = vector.broadcast %3 : vector<1x128xf32> to vector<2x128xf32>
    %5 = arith.addf %2, %4 : vector<2x128xf32>
    %c0_5 = arith.constant 0 : index
    %c0_6 = arith.constant 0 : index
    %6 = vector.load %arg3[%c0_5, %c0_6] : memref<2x128xf32, #tpu.memory_space<vmem>>, vector<2x128xf32>
    tpu.vector_store %arg3[%c0_5, %c0_6], %5 {strides = array<i32>} : memref<2x128xf32, #tpu.memory_space<vmem>>, vector<2x128xf32>,
    return
  }
}

</mosaic_0001>

<llo_original>
// kernel: _braindecode_forward.1
$region0: #{_braindecode_forward.1}
  #allocation0 [shape = 'u32[]', space=smem, size = 0x4, offset = 0x4, fixed_abs, tag = 'smem constant byte address 0x4 - core index']
  #allocation1 [shape = 'u32[144,128]{1,0:T(1,128)}', space=vmem, size = 0x12000, scoped, tag = 'internal scratch']
  %s0 = inlined_call_operand.vmem [shape: bf16[2,128], index: 0, kind: input, shape index: {}]
  %s1 = inlined_call_operand.hbm [shape: bf16[128,128], index: 1, kind: input, shape index: {}]
  %s2 = inlined_call_operand.vmem [shape: f32[1,128], index: 2, kind: input, shape index: {}]
  %s3 = inlined_call_operand.hbm [shape: f32[2,128], index: 3, kind: output, shape index: {}]
  %s4 = sld [smem:[#allocation0]]
  $region26: #{_braindecode_forward.1} parent=0
    _
  %s6 = ssub.s32 1, %s4
  %s7 = scalar_select 0, %s6, %s4
  $region1: #{_braindecode_forward.1} parent=0
    #allocation2 [shape = 'u8[32768]{0}', space=vmem, size = 0x8000, scoped, tag = 'input window, operand 1, single buffered']
    #allocation3 [shape = 's32[1]{0}', space=sflag, size = 0x4, scoped, tag = 'scoped memory for _braindecode_forward.1']
    #allocation4 [shape = 's32[1]{0}', space=sflag, size = 0x4, scoped, tag = 'scoped memory for _braindecode_forward.1']
    #allocation5 [shape = 'u8[1024]{0}', space=vmem, size = 0x400, scoped, tag = 'output window, operand 0, single buffered']
    %8 = vsyncpa [#allocation3], 0
    %9 = vsyncpa [#allocation4], 0
    // Predicated region
    $region2: #{_braindecode_forward.1} parent=1 // pred_check
      _
    $region3: #{_braindecode_forward.1} parent=1 // pred_check_branch
      %11 = sbr.rel (0) target = $region5
    $region4: #{_braindecode_forward.1} parent=1 // pred_region
      _
    $region5: #{_braindecode_forward.1} parent=1 // pred_fallthru
      _
    // Predicated region
    $region6: #{_braindecode_forward.1} parent=1 // pred_check
      _
    $region7: #{_braindecode_forward.1} parent=1 // pred_check_branch
      %13 = sbr.rel (0) target = $region9
    $region8: #{_braindecode_forward.1} parent=1 // pred_region
      %s15 = ssub.s32 1024, 1024
      %16 = vsyncadd [#allocation3], %s15
      %s17 = sshll.u32 [#allocation2], 4
      %s18 = int_to_ptr.vmem [resolvable:$true] %s17
      %23 = dma.hbm_to_vmem [thread:$0]  %s1, 1024, %s18, [#allocation3], 64, 64, 4
    $region9: #{_braindecode_forward.1} parent=1 // pred_fallthru
      _
    // Predicated region
    $region10: #{_braindecode_forward.1} parent=1 // pred_check
      _
    $region11: #{_braindecode_forward.1} parent=1 // pred_check_branch
      %25 = sbr.rel (0) target = $region13
    $region12: #{_braindecode_forward.1} parent=1 // pred_region
      _
    $region13: #{_braindecode_forward.1} parent=1 // pred_fallthru
      _
    // Predicated region
    $region14: #{_braindecode_forward.1} parent=1 // pred_check
      _
    $region15: #{_braindecode_forward.1} parent=1 // pred_check_branch
      %27 = sbr.rel (0) target = $region17
    $region16: #{_braindecode_forward.1} parent=1 // pred_region
      %28 = dma.done [#allocation3], 1024
    $region17: #{_braindecode_forward.1} parent=1 // pred_fallthru
      _
    %v30 = vld [vmem:[%s0] sm:$0x1]
    %v31 = vld [vmem:[#allocation2] sm:$0xf]
    %v32 = vld [vmem:[#allocation2 + $0x4] sm:$0xf]
    %v33 = vld [vmem:[#allocation2 + $0x8] sm:$0xf]
    %v34 = vld [vmem:[#allocation2 + $0xc] sm:$0xf]
    %v35 = vld [vmem:[#allocation2 + $0x10] sm:$0xf]
    %v36 = vld [vmem:[#allocation2 + $0x14] sm:$0xf]
    %v37 = vld [vmem:[#allocation2 + $0x18] sm:$0xf]
    %v38 = vld [vmem:[#allocation2 + $0x1c] sm:$0xf]
    %v39 = vld [vmem:[#allocation2 + $0x20] sm:$0xf]
    %v40 = vld [vmem:[#allocation2 + $0x24] sm:$0xf]
    %v41 = vld [vmem:[#allocation2 + $0x28] sm:$0xf]
    %v42 = vld [vmem:[#allocation2 + $0x2c] sm:$0xf]
    %v43 = vld [vmem:[#allocation2 + $0x30] sm:$0xf]
    %v44 = vld [vmem:[#allocation2 + $0x34] sm:$0xf]
    %v45 = vld [vmem:[#allocation2 + $0x38] sm:$0xf]
    %v46 = vld [vmem:[#allocation2 + $0x3c] sm:$0xf]
    %v47 = vld [vmem:[%s2] sm:$0x1]
    %v49 = vlaneseq
    %v50 = vshrl.u32 %v49, 7
    %v51 = vsub.s32 0, %v50
    %v52 = vrot.slane %v47, %v51
    %v70 = vunpack.c.l.b16 %v31
    %v71 = vunpack.c.l.b16 %v32
    %v72 = vunpack.c.l.b16 %v33
    %v73 = vunpack.c.l.b16 %v34
    %v74 = vunpack.c.l.b16 %v35
    %v75 = vunpack.c.l.b16 %v36
    %v76 = vunpack.c.l.b16 %v37
    %v77 = vunpack.c.l.b16 %v38
    %v78 = vunpack.c.l.b16 %v39
    %v79 = vunpack.c.l.b16 %v40
    %v80 = vunpack.c.l.b16 %v41
    %v81 = vunpack.c.l.b16 %v42
    %v82 = vunpack.c.l.b16 %v43
    %v83 = vunpack.c.l.b16 %v44
    %v84 = vunpack.c.l.b16 %v45
    %v85 = vunpack.c.l.b16 %v46
    %v86 = vpack.c.b16 %v71, %v70
    %v87 = vpack.c.b16 %v73, %v72
    %v88 = vpack.c.b16 %v75, %v74
    %v89 = vpack.c.b16 %v77, %v76
    %v90 = vpack.c.b16 %v79, %v78
    %v91 = vpack.c.b16 %v81, %v80
    %v92 = vpack.c.b16 %v83, %v82
    %v93 = vpack.c.b16 %v85, %v84
    %102 = vmatprep.subr.bf16.mxu0 0
    %103 = vmatpush1.bf16.msra.mxu0 %v86
    %104 = vmatprep.subr.bf16.mxu0 0
    %105 = vmatpush1.bf16.msra.mxu0 %v87
    %106 = vmatprep.subr.bf16.mxu0 0
    %107 = vmatpush1.bf16.msra.mxu0 %v88
    %108 = vmatprep.subr.bf16.mxu0 0
    %109 = vmatpush1.bf16.msra.mxu0 %v89
    %110 = vmatprep.subr.bf16.mxu0 0
    %111 = vmatpush1.bf16.msra.mxu0 %v90
    %112 = vmatprep.subr.bf16.mxu0 0
    %113 = vmatpush1.bf16.msra.mxu0 %v91
    %114 = vmatprep.subr.bf16.mxu0 0
    %115 = vmatpush1.bf16.msra.mxu0 %v92
    %116 = vmatprep.subr.bf16.mxu0 0
    %117 = vmatpush1.bf16.msra.mxu0 %v93
    %118 = vmatprep.subr.bf16.mxu0 0
    %119 = vmatpush1.bf16.msra.mxu0 0
    %120 = vmatprep.subr.bf16.mxu0 0
    %121 = vmatpush1.bf16.msra.mxu0 0
    %122 = vmatprep.subr.bf16.mxu0 0
    %123 = vmatpush1.bf16.msra.mxu0 0
    %124 = vmatprep.subr.bf16.mxu0 0
    %125 = vmatpush1.bf16.msra.mxu0 0
    %126 = vmatprep.subr.bf16.mxu0 0
    %127 = vmatpush1.bf16.msra.mxu0 0
    %128 = vmatprep.subr.bf16.mxu0 0
    %129 = vmatpush1.bf16.msra.mxu0 0
    %130 = vmatprep.subr.bf16.mxu0 0
    %131 = vmatpush1.bf16.msra.mxu0 0
    %132 = vmatprep.subr.bf16.mxu0 0
    %133 = vmatpush1.bf16.msra.mxu0 0
    %134 = vmatprep.mubr.bf16.mxu0 0
    %135 = vmatmul.mubr.bf16.gmra.mrb[0].mxu0 %v30
    %v136 = vpop.f32.mrb[0].mxu0
    %v137 = vadd.f32 %v52, %v136
    %v138 = vpop.f32.mrb[0].mxu0
    %v139 = vpop.f32.mrb[0].mxu0
    %v140 = vpop.f32.mrb[0].mxu0
    %141 = vdwg.mxu0
    %142 = vst [vmem:[#allocation5] sm:$0x3] %v137
    // Predicated region
    $region18: #{_braindecode_forward.1} parent=1 // pred_check
      _
    $region19: #{_braindecode_forward.1} parent=1 // pred_check_branch
      %144 = sbr.rel (0) target = $region21
    $region20: #{_braindecode_forward.1} parent=1 // pred_region
      %s146 = ssub.s32 32, 32
      %147 = vsyncadd [#allocation4], %s146
      %s149 = sshll.u32 [#allocation5], 4
      %s150 = int_to_ptr.vmem [resolvable:$true] %s149
      %152 = dma.vmem_to_hbm [thread:$0]  %s150, 32, %s3, [#allocation4]
    $region21: #{_braindecode_forward.1} parent=1 // pred_fallthru
      _
    // Predicated region
    $region22: #{_braindecode_forward.1} parent=1 // pred_check
      _
    $region23: #{_braindecode_forward.1} parent=1 // pred_check_branch
      %154 = sbr.rel (0) target = $region25
    $region24: #{_braindecode_forward.1} parent=1 // pred_region
      %155 = dma.done [#allocation4], 32
    $region25: #{_braindecode_forward.1} parent=1 // pred_fallthru
      _
    %156 = vsyncpa [#allocation3], 1
    %157 = vsyncpa [#allocation4], 1

</llo_original>
